<compile_context>
chip_gen: v7x
topology: tpu7x:2x2x1
jax: 0.10.0
libtpu: 0.0.40
codegen_flags: <defaults>
</compile_context>

<pallas_src>
import functools

import numpy as np
import jax
import jax.numpy as jnp
from jax.experimental import pallas as pl
from jax.experimental.pallas import tpu as pltpu


def _pool_matrix(n_in):
    """0/1 selection matrix for the 1-D sum of AvgPool(3, stride=2, pad=1)."""
    n_out = (n_in - 1) // 2 + 1
    i = np.arange(n_out, dtype=np.int64)[:, None]
    r = np.arange(n_in, dtype=np.int64)[None, :]
    # output i sums input rows {2i-1, 2i, 2i+1} (out-of-range rows are padding=0)
    return (np.abs(r - 2 * i) <= 1).astype(np.float32)          # (n_out, n_in)


def _composed_pool_matrices(h, w, ratio):
    """Compose all stages: y = Pv_total @ x @ PhT_total * (1/9)**ratio."""
    pv_total = None
    pht_total = None
    hh, ww = h, w
    for _ in range(ratio):
        pv_s = _pool_matrix(hh)            # (ho, hh)
        ph_sT = _pool_matrix(ww).T         # (ww, wo)
        pv_total = pv_s if pv_total is None else pv_s @ pv_total
        pht_total = ph_sT if pht_total is None else pht_total @ ph_sT
        hh = pv_s.shape[0]
        ww = ph_sT.shape[1]
    # Entries are small exact integers (counts of overlapping windows).
    return pv_total, pht_total, hh, ww


def _pick_plane_batch(num_planes, plane_bytes, max_bc=16, budget_bytes=4 << 20):
    """Batch small planes per grid step; keep >=2 programs when we have planes."""
    best = 1
    for bc in range(1, num_planes + 1):
        if bc > max_bc or bc * plane_bytes > budget_bytes:
            break
        if num_planes % bc:
            continue
        if num_planes >= 4 and bc > 1 and num_planes // bc < 2:
            continue
        best = bc
    return best


def _input_injection_kernel(x_ref, pv_ref, pht_ref, o_ref, *,
                            planes_per_block, scale, inter_dtype):
    """x_ref: (bc, H, W); pv_ref: (Hf, H); pht_ref: (W, Wf); o_ref: (bc, Hf, Wf)."""
    pv = pv_ref[...]        # resident across the whole grid (constant index_map)
    pht = pht_ref[...]
    for b in range(planes_per_block):                 # static, small unroll
        # All `ratio` vertical pools at once (MXU), then all horizontal pools.
        t = jnp.dot(pv, x_ref[b], preferred_element_type=inter_dtype)   # (Hf, W)
        s = jnp.dot(t, pht, preferred_element_type=jnp.float32)         # (Hf, Wf)
        o_ref[b] = (s * jnp.float32(scale)).astype(o_ref.dtype)


def input_injection(x_nchw, ratio):
    """Pallas implementation of InputInjection: AvgPool2d(3,2,1) applied `ratio` times."""
    if ratio == 0:
        return x_nchw
    n, c, h, w = x_nchw.shape
    in_dtype = jnp.dtype(x_nchw.dtype)

    pv_np, pht_np, hf, wf = _composed_pool_matrices(h, w, ratio)

    # bf16/f16 activations -> low-precision matmul path (matrices are exact
    # small integers, so the cast is lossless); f32 stays all-f32 for accuracy.
    low_precision = in_dtype in (jnp.dtype(jnp.bfloat16), jnp.dtype(jnp.float16))
    mat_dtype = in_dtype if low_precision else jnp.dtype(jnp.float32)
    inter_dtype = mat_dtype

    pv = jnp.asarray(pv_np, dtype=mat_dtype)      # (hf, h)
    pht = jnp.asarray(pht_np, dtype=mat_dtype)    # (w, wf)

    num_planes = n * c
    bc = _pick_plane_batch(num_planes, h * w * in_dtype.itemsize)
    grid = (num_planes // bc,)

    # Explicit VMEM budget: double-buffered input/output blocks + resident
    # matrices + f32 intermediates, with headroom; clamped to v7x physical.
    est = (2 * bc * h * w * in_dtype.itemsize
           + 2 * bc * hf * wf * in_dtype.itemsize
           + 2 * (hf * h + w * wf) * jnp.dtype(mat_dtype).itemsize
           + bc * hf * w * 4
           + (1 << 20))
    vmem_limit = int(min(max(2 * est, 32 << 20), 64 << 20))
    # TODO(synk): for full-resolution inputs on v7x, add a W-band grid axis
    # (halo via pl.Element) instead of relying on the full-plane block.

    x_planes = x_nchw.reshape(num_planes, h, w)   # independent planes

    kernel = functools.partial(
        _input_injection_kernel,
        planes_per_block=bc,
        scale=(1.0 / 9.0) ** ratio,
        inter_dtype=inter_dtype)

    out = pl.pallas_call(
        kernel,
        out_shape=jax.ShapeDtypeStruct((num_planes, hf, wf), in_dtype),
        grid=grid,
        in_specs=[
            pl.BlockSpec((bc, h, w), lambda i: (i, 0, 0)),
            pl.BlockSpec((hf, h), lambda i: (0, 0)),   # constant block -> resident
            pl.BlockSpec((w, wf), lambda i: (0, 0)),   # constant block -> resident
        ],
        out_specs=pl.BlockSpec((bc, hf, wf), lambda i: (i, 0, 0)),
        compiler_params=pltpu.CompilerParams(
            dimension_semantics=("parallel",),
            vmem_limit_bytes=vmem_limit),
    )(x_planes, pv, pht)

    return out.reshape(n, c, hf, wf)


def reference(x_nchw, ratio):
    """Pure-JAX reference (AvgPool2d(3, 2, 1), count_include_pad=True), f32."""
    x = x_nchw.astype(jnp.float32)
    for _ in range(ratio):
        s = jax.lax.reduce_window(
            x, 0.0, jax.lax.add,
            window_dimensions=(1, 1, 3, 3),
            window_strides=(1, 1, 2, 2),
            padding=[(0, 0), (0, 0), (1, 1), (1, 1)])
        x = s / 9.0
    return x


if __name__ == "__main__":
    key = jax.random.PRNGKey(0)

    # Primary check: f32 NCHW input, ratio=2 (like the PyTorch module).
    ratio = 2
    x = jax.random.normal(key, (2, 4, 16, 16), jnp.float32)
    out = jax.block_until_ready(input_injection(x, ratio))
    ref = jax.block_until_ready(reference(x, ratio))
    assert out.shape == (2, 4, 4, 4), out.shape
    assert jnp.allclose(out, ref, atol=1e-5, rtol=1e-5), \
        float(jnp.max(jnp.abs(out - ref)))

    # Odd spatial sizes + deeper ratio (exercises padding / output sizing).
    x2 = jax.random.normal(jax.random.PRNGKey(1), (1, 2, 15, 17), jnp.float32)
    out2 = jax.block_until_ready(input_injection(x2, 3))
    ref2 = jax.block_until_ready(reference(x2, 3))
    assert out2.shape == (1, 2, 2, 3), out2.shape
    assert jnp.allclose(out2, ref2, atol=1e-5, rtol=1e-5), \
        float(jnp.max(jnp.abs(out2 - ref2)))

    # bf16 activations take the low-precision MXU path (looser tolerance).
    x3 = jax.random.normal(jax.random.PRNGKey(2), (1, 3, 32, 48),
                           jnp.float32).astype(jnp.bfloat16)
    out3 = jax.block_until_ready(input_injection(x3, 2))
    ref3 = jax.block_until_ready(reference(x3, 2))
    assert out3.shape == (1, 3, 8, 12), out3.shape
    assert jnp.allclose(out3.astype(jnp.float32), ref3, atol=5e-2, rtol=5e-2), \
        float(jnp.max(jnp.abs(out3.astype(jnp.float32) - ref3)))

    print("KERNEL_OK")
</pallas_src>

<mosaic_0001>
module attributes {stable_mosaic.version = 11 : i64} {
  func.func @_input_injection_kernel(%arg0: i32, %arg1: memref<4x16x16xf32, #tpu.memory_space<vmem>>, %arg2: memref<4x16xf32, #tpu.memory_space<vmem>>, %arg3: memref<16x4xf32, #tpu.memory_space<vmem>>, %arg4: memref<4x4x4xf32, #tpu.memory_space<vmem>>) attributes {dimension_semantics = [#tpu.dimension_semantics<parallel>], iteration_bounds = array<i64: 2>, scalar_prefetch = 0 : i64, scratch_operands = 0 : i64, tpu.core_type = #tpu.core_type<tc>, window_params = [{transform_indices = @transform_0, window_bounds = array<i64: 4, 16, 16>}, {pipeline_mode = #tpu.pipeline_mode<synchronous>, transform_indices = @transform_1, window_bounds = array<i64: 4, 16>}, {pipeline_mode = #tpu.pipeline_mode<synchronous>, transform_indices = @transform_2, window_bounds = array<i64: 16, 4>}, {transform_indices = @transform_3, window_bounds = array<i64: 4, 4, 4>}]} {
    %c0 = arith.constant 0 : index
    %c0_0 = arith.constant 0 : index
    %0 = vector.load %arg2[%c0, %c0_0] : memref<4x16xf32, #tpu.memory_space<vmem>>, vector<4x16xf32>
    %c0_1 = arith.constant 0 : index
    %c0_2 = arith.constant 0 : index
    %1 = vector.load %arg3[%c0_1, %c0_2] : memref<16x4xf32, #tpu.memory_space<vmem>>, vector<16x4xf32>
    %c0_3 = arith.constant 0 : index
    %c0_4 = arith.constant 0 : index
    %c0_5 = arith.constant 0 : index
    %2 = vector.load %arg1[%c0_3, %c0_4, %c0_5] : memref<4x16x16xf32, #tpu.memory_space<vmem>>, vector<1x16x16xf32>
    %3 = vector.shape_cast %2 : vector<1x16x16xf32> to vector<16x16xf32>
    %cst = arith.constant dense<0.000000e+00> : vector<4x16xf32>
    %4 = tpu.matmul %0, %3, %cst {dimension_numbers = #tpu.dot_dimension_numbers<[1], [0], [0], [1], [0, 0, 1, 1], [], []>} : vector<4x16xf32>, vector<16x16xf32>, vector<4x16xf32> -> vector<4x16xf32>
    %cst_6 = arith.constant dense<0.000000e+00> : vector<4x4xf32>
    %5 = tpu.matmul %4, %1, %cst_6 {dimension_numbers = #tpu.dot_dimension_numbers<[1], [0], [0], [1], [0, 0, 1, 1], [], []>} : vector<4x16xf32>, vector<16x4xf32>, vector<4x4xf32> -> vector<4x4xf32>
    %cst_7 = arith.constant 0.0123456791 : f32
    %6 = vector.broadcast %cst_7 : f32 to vector<4x4xf32>
    %7 = arith.mulf %5, %6 : vector<4x4xf32>
    %c0_8 = arith.constant 0 : index
    %c0_9 = arith.constant 0 : index
    %c0_10 = arith.constant 0 : index
    %8 = vector.load %arg4[%c0_8, %c0_9, %c0_10] : memref<4x4x4xf32, #tpu.memory_space<vmem>>, vector<1x4x4xf32>
    %9 = vector.shape_cast %8 : vector<1x4x4xf32> to vector<4x4xf32>
    %10 = vector.shape_cast %7 : vector<4x4xf32> to vector<1x4x4xf32>
    tpu.vector_store %arg4[%c0_8, %c0_9, %c0_10], %10 {strides = array<i32>} : memref<4x4x4xf32, #tpu.memory_space<vmem>>, vector<1x4x4xf32>,
    %c1 = arith.constant 1 : index
    %c0_11 = arith.constant 0 : index
    %c0_12 = arith.constant 0 : index
    %11 = vector.load %arg1[%c1, %c0_11, %c0_12] : memref<4x16x16xf32, #tpu.memory_space<vmem>>, vector<1x16x16xf32>
    %12 = vector.shape_cast %11 : vector<1x16x16xf32> to vector<16x16xf32>
    %cst_13 = arith.constant dense<0.000000e+00> : vector<4x16xf32>
    %13 = tpu.matmul %0, %12, %cst_13 {dimension_numbers = #tpu.dot_dimension_numbers<[1], [0], [0], [1], [0, 0, 1, 1], [], []>} : vector<4x16xf32>, vector<16x16xf32>, vector<4x16xf32> -> vector<4x16xf32>
    %cst_14 = arith.constant dense<0.000000e+00> : vector<4x4xf32>
    %14 = tpu.matmul %13, %1, %cst_14 {dimension_numbers = #tpu.dot_dimension_numbers<[1], [0], [0], [1], [0, 0, 1, 1], [], []>} : vector<4x16xf32>, vector<16x4xf32>, vector<4x4xf32> -> vector<4x4xf32>
    %cst_15 = arith.constant 0.0123456791 : f32
    %15 = vector.broadcast %cst_15 : f32 to vector<4x4xf32>
    %16 = arith.mulf %14, %15 : vector<4x4xf32>
    %c1_16 = arith.constant 1 : index
    %c0_17 = arith.constant 0 : index
    %c0_18 = arith.constant 0 : index
    %17 = vector.load %arg4[%c1_16, %c0_17, %c0_18] : memref<4x4x4xf32, #tpu.memory_space<vmem>>, vector<1x4x4xf32>
    %18 = vector.shape_cast %17 : vector<1x4x4xf32> to vector<4x4xf32>
    %19 = vector.shape_cast %16 : vector<4x4xf32> to vector<1x4x4xf32>
    tpu.vector_store %arg4[%c1_16, %c0_17, %c0_18], %19 {strides = array<i32>} : memref<4x4x4xf32, #tpu.memory_space<vmem>>, vector<1x4x4xf32>,
    %c2 = arith.constant 2 : index
    %c0_19 = arith.constant 0 : index
    %c0_20 = arith.constant 0 : index
    %20 = vector.load %arg1[%c2, %c0_19, %c0_20] : memref<4x16x16xf32, #tpu.memory_space<vmem>>, vector<1x16x16xf32>
    %21 = vector.shape_cast %20 : vector<1x16x16xf32> to vector<16x16xf32>
    %cst_21 = arith.constant dense<0.000000e+00> : vector<4x16xf32>
    %22 = tpu.matmul %0, %21, %cst_21 {dimension_numbers = #tpu.dot_dimension_numbers<[1], [0], [0], [1], [0, 0, 1, 1], [], []>} : vector<4x16xf32>, vector<16x16xf32>, vector<4x16xf32> -> vector<4x16xf32>
    %cst_22 = arith.constant dense<0.000000e+00> : vector<4x4xf32>
    %23 = tpu.matmul %22, %1, %cst_22 {dimension_numbers = #tpu.dot_dimension_numbers<[1], [0], [0], [1], [0, 0, 1, 1], [], []>} : vector<4x16xf32>, vector<16x4xf32>, vector<4x4xf32> -> vector<4x4xf32>
    %cst_23 = arith.constant 0.0123456791 : f32
    %24 = vector.broadcast %cst_23 : f32 to vector<4x4xf32>
    %25 = arith.mulf %23, %24 : vector<4x4xf32>
    %c2_24 = arith.constant 2 : index
    %c0_25 = arith.constant 0 : index
    %c0_26 = arith.constant 0 : index
    %26 = vector.load %arg4[%c2_24, %c0_25, %c0_26] : memref<4x4x4xf32, #tpu.memory_space<vmem>>, vector<1x4x4xf32>
    %27 = vector.shape_cast %26 : vector<1x4x4xf32> to vector<4x4xf32>
    %28 = vector.shape_cast %25 : vector<4x4xf32> to vector<1x4x4xf32>
    tpu.vector_store %arg4[%c2_24, %c0_25, %c0_26], %28 {strides = array<i32>} : memref<4x4x4xf32, #tpu.memory_space<vmem>>, vector<1x4x4xf32>,
    %c3 = arith.constant 3 : index
    %c0_27 = arith.constant 0 : index
    %c0_28 = arith.constant 0 : index
    %29 = vector.load %arg1[%c3, %c0_27, %c0_28] : memref<4x16x16xf32, #tpu.memory_space<vmem>>, vector<1x16x16xf32>
    %30 = vector.shape_cast %29 : vector<1x16x16xf32> to vector<16x16xf32>
    %cst_29 = arith.constant dense<0.000000e+00> : vector<4x16xf32>
    %31 = tpu.matmul %0, %30, %cst_29 {dimension_numbers = #tpu.dot_dimension_numbers<[1], [0], [0], [1], [0, 0, 1, 1], [], []>} : vector<4x16xf32>, vector<16x16xf32>, vector<4x16xf32> -> vector<4x16xf32>
    %cst_30 = arith.constant dense<0.000000e+00> : vector<4x4xf32>
    %32 = tpu.matmul %31, %1, %cst_30 {dimension_numbers = #tpu.dot_dimension_numbers<[1], [0], [0], [1], [0, 0, 1, 1], [], []>} : vector<4x16xf32>, vector<16x4xf32>, vector<4x4xf32> -> vector<4x4xf32>
    %cst_31 = arith.constant 0.0123456791 : f32
    %33 = vector.broadcast %cst_31 : f32 to vector<4x4xf32>
    %34 = arith.mulf %32, %33 : vector<4x4xf32>
    %c3_32 = arith.constant 3 : index
    %c0_33 = arith.constant 0 : index
    %c0_34 = arith.constant 0 : index
    %35 = vector.load %arg4[%c3_32, %c0_33, %c0_34] : memref<4x4x4xf32, #tpu.memory_space<vmem>>, vector<1x4x4xf32>
    %36 = vector.shape_cast %35 : vector<1x4x4xf32> to vector<4x4xf32>
    %37 = vector.shape_cast %34 : vector<4x4xf32> to vector<1x4x4xf32>
    tpu.vector_store %arg4[%c3_32, %c0_33, %c0_34], %37 {strides = array<i32>} : memref<4x4x4xf32, #tpu.memory_space<vmem>>, vector<1x4x4xf32>,
    return
  }
  func.func @transform_0(%arg0: i32) -> (i32, i32, i32) {
    %c0_i32 = arith.constant 0 : i32
    %c0_i32_0 = arith.constant 0 : i32
    %c0_i32_1 = arith.constant 0 : i32
    return %arg0, %c0_i32, %c0_i32_0 : i32, i32, i32
  }
  func.func @transform_1(%arg0: i32) -> (i32, i32) {
    %c0_i32 = arith.constant 0 : i32
    %c0_i32_0 = arith.constant 0 : i32
    %c0_i32_1 = arith.constant 0 : i32
    return %c0_i32, %c0_i32_0 : i32, i32
  }
  func.func @transform_2(%arg0: i32) -> (i32, i32) {
    %c0_i32 = arith.constant 0 : i32
    %c0_i32_0 = arith.constant 0 : i32
    %c0_i32_1 = arith.constant 0 : i32
    return %c0_i32, %c0_i32_0 : i32, i32
  }
  func.func @transform_3(%arg0: i32) -> (i32, i32, i32) {
    %c0_i32 = arith.constant 0 : i32
    %c0_i32_0 = arith.constant 0 : i32
    %c0_i32_1 = arith.constant 0 : i32
    return %arg0, %c0_i32, %c0_i32_0 : i32, i32, i32
  }
}

</mosaic_0001>

<llo_original>
// kernel: tpu_custom_call.1
$region0: #{tpu_custom_call.1}
  #allocation0 [shape = 'u32[]', space=smem, size = 0x4, offset = 0x4, fixed_abs, tag = 'smem constant byte address 0x4 - core index']
  #allocation1 [shape = 'u32[144,128]{1,0:T(1,128)}', space=vmem, size = 0x12000, scoped, tag = 'internal scratch']
  %s0 = inlined_call_operand.hbm [shape: f32[8,16,16], index: 0, kind: input, shape index: {}]
  %s1 = inlined_call_operand.vmem [shape: f32[4,16], index: 1, kind: input, shape index: {}]
  %s2 = inlined_call_operand.vmem [shape: f32[16,4], index: 2, kind: input, shape index: {}]
  %s3 = inlined_call_operand.vmem [shape: f32[8,4,4], index: 3, kind: output, shape index: {}]
  %s4 = sld [smem:[#allocation0]]
  $region49: #{tpu_custom_call.1} parent=0
    _
  %s6 = ssub.s32 1, %s4
  %s7 = scalar_select 0, %s6, %s4
  $region1: #{tpu_custom_call.1} parent=0
    #allocation2 [shape = 'u8[65536]{0}', space=vmem, size = 0x10000, scoped, tag = 'input window, operand 0']
    #allocation3 [shape = 's32[2]{0}', space=sflag, size = 0x8, scoped, tag = 'scoped memory for tpu_custom_call.1']
    %8 = vsyncpa [#allocation3], 0
    %s9 = scalar_lea.sflag [#allocation3], 1
    %10 = vsyncpa %s9, 0
    loop: start=0, step=1, limit=4
    $region2: #{tpu_custom_call.1} parent=1 // loop_pre_header
      _
    $region3: #{tpu_custom_call.1} parent=1 // loop_header
      %s12 = sphi 0, %s16
      %p13 = scmp.ge.s32.totalorder %s12, 4
      %s22 = sphi 0, %s24
      %s25 = sphi 0, %s22
      %s26 = sphi 0, %s25
      %s42 = sphi 0, %s26
      %s46 = sphi 0, %s46
      %s48 = sphi 0, %s46
      %s49 = sphi 0, %s48
      %s63 = sphi 0, %s49
      %s67 = sphi 0, %s67
      %s69 = sphi 0, %s67
      %s70 = sphi 0, %s69
      %s84 = sphi 0, %s70
      %s90 = sphi 0, %s92
      %s93 = sphi 0, %s90
      %s94 = sphi 0, %s93
      %s110 = sphi 0, %s94
    $region4: #{tpu_custom_call.1} parent=1 // loop_header_branch
      %15 = sbr.rel (%p13) target = $region8
    $region5: #{tpu_custom_call.1} parent=1 // loop_body
      %s17 = ssub.s32 %s12, 1
      %s18 = ssub.s32 %s12, 2
      %s19 = sadd.s32 %s12, 1
      %s20 = ssub.s32 %s12, %s19
      %p21 = scmp.eq.s32.totalorder %s20, 0
      %s23 = sadd.s32 %s22, 1
      %s24 = scalar_select %p21, %s22, %s23
      %p27 = pneg %p21
      %p28 = scmp.eq.s32.totalorder %s12, 1
      %p29 = por %p27, %p28
      %p30 = scmp.ne.s32.totalorder %s22, %s25
      %p31 = scmp.eq.s32.totalorder %s12, 0
      %p32 = por %p30, %p31
      %p33 = scmp.ne.s32.totalorder %s22, %s25
      %p34 = scmp.eq.s32.totalorder %s17, 1
      %p35 = por %p33, %p34
      %p36 = scmp.ne.s32.totalorder %s25, %s26
      %p37 = scmp.eq.s32.totalorder %s17, 0
      %p38 = por %p36, %p37
      %p39 = scmp.ne.s32.totalorder %s25, %s26
      %p40 = scmp.eq.s32.totalorder %s18, 1
      %p41 = por %p39, %p40
      %p43 = scmp.ne.s32.totalorder %s26, %s42
      %p44 = scmp.eq.s32.totalorder %s18, 0
      %p45 = por %p43, %p44
      %s47 = sadd.s32 %s46, 1
      %p50 = scmp.eq.s32.totalorder %s12, 1
      %p51 = scmp.ne.s32.totalorder %s46, %s48
      %p52 = scmp.eq.s32.totalorder %s12, 0
      %p53 = por %p51, %p52
      %p54 = scmp.ne.s32.totalorder %s46, %s48
      %p55 = scmp.eq.s32.totalorder %s17, 1
      %p56 = por %p54, %p55
      %p57 = scmp.ne.s32.totalorder %s48, %s49
      %p58 = scmp.eq.s32.totalorder %s17, 0
      %p59 = por %p57, %p58
      %p60 = scmp.ne.s32.totalorder %s48, %s49
      %p61 = scmp.eq.s32.totalorder %s18, 1
      %p62 = por %p60, %p61
      %p64 = scmp.ne.s32.totalorder %s49, %s63
      %p65 = scmp.eq.s32.totalorder %s18, 0
      %p66 = por %p64, %p65
      %s68 = sadd.s32 %s67, 1
      %p71 = scmp.eq.s32.totalorder %s12, 1
      %p72 = scmp.ne.s32.totalorder %s67, %s69
      %p73 = scmp.eq.s32.totalorder %s12, 0
      %p74 = por %p72, %p73
      %p75 = scmp.ne.s32.totalorder %s67, %s69
      %p76 = scmp.eq.s32.totalorder %s17, 1
      %p77 = por %p75, %p76
      %p78 = scmp.ne.s32.totalorder %s69, %s70
      %p79 = scmp.eq.s32.totalorder %s17, 0
      %p80 = por %p78, %p79
      %p81 = scmp.ne.s32.totalorder %s69, %s70
      %p82 = scmp.eq.s32.totalorder %s18, 1
      %p83 = por %p81, %p82
      %p85 = scmp.ne.s32.totalorder %s70, %s84
      %p86 = scmp.eq.s32.totalorder %s18, 0
      %p87 = por %p85, %p86
      %s88 = ssub.s32 %s12, %s19
      %p89 = scmp.eq.s32.totalorder %s88, 0
      %s91 = sadd.s32 %s90, 1
      %s92 = scalar_select %p89, %s90, %s91
      %p95 = pneg %p89
      %p96 = scmp.eq.s32.totalorder %s12, 1
      %p97 = por %p95, %p96
      %p98 = scmp.ne.s32.totalorder %s90, %s93
      %p99 = scmp.eq.s32.totalorder %s12, 0
      %p100 = por %p98, %p99
      %p101 = scmp.ne.s32.totalorder %s90, %s93
      %p102 = scmp.eq.s32.totalorder %s17, 1
      %p103 = por %p101, %p102
      %p104 = scmp.ne.s32.totalorder %s93, %s94
      %p105 = scmp.eq.s32.totalorder %s17, 0
      %p106 = por %p104, %p105
      %p107 = scmp.ne.s32.totalorder %s93, %s94
      %p108 = scmp.eq.s32.totalorder %s18, 1
      %p109 = por %p107, %p108
      %p111 = scmp.ne.s32.totalorder %s94, %s110
      %p112 = scmp.eq.s32.totalorder %s18, 0
      %p113 = por %p111, %p112
      %p114 = scmp.le.s32.totalorder 1, %s12
      %p115 = scmp.lt.s32.totalorder %s12, 3
      %p116 = pnand %p114, %p115
      %p117 = pneg %p116
      // Predicated region
      $region9: #{tpu_custom_call.1} parent=5 // pred_check
        _
      $region10: #{tpu_custom_call.1} parent=5 // pred_check_branch
        %119 = sbr.rel (%p116) target = $region12
      $region11: #{tpu_custom_call.1} parent=5 // pred_region
        %s120 = ssub.s32 %s12, 1
        // Predicated region
        $region13: #{tpu_custom_call.1} parent=11 // pred_check
          %p121 = pneg %p59
        $region14: #{tpu_custom_call.1} parent=11 // pred_check_branch
          %123 = sbr.rel (%p121) target = $region16
        $region15: #{tpu_custom_call.1} parent=11 // pred_region
          _
        $region16: #{tpu_custom_call.1} parent=11 // pred_fallthru
          _
        // Predicated region
        $region17: #{tpu_custom_call.1} parent=11 // pred_check
          %p124 = pneg %p80
        $region18: #{tpu_custom_call.1} parent=11 // pred_check_branch
          %126 = sbr.rel (%p124) target = $region20
        $region19: #{tpu_custom_call.1} parent=11 // pred_region
          _
        $region20: #{tpu_custom_call.1} parent=11 // pred_fallthru
          _
      $region12: #{tpu_custom_call.1} parent=5 // pred_fallthru
        _
      %p127 = scmp.lt.s32.totalorder %s12, 2
      // Predicated region
      $region21: #{tpu_custom_call.1} parent=5 // pred_check
        %p128 = pneg %p127
      $region22: #{tpu_custom_call.1} parent=5 // pred_check_branch
        %130 = sbr.rel (%p128) target = $region24
      $region23: #{tpu_custom_call.1} parent=5 // pred_region
        // Predicated region
        $region25: #{tpu_custom_call.1} parent=23 // pred_check
          %p131 = pneg %p32
        $region26: #{tpu_custom_call.1} parent=23 // pred_check_branch
          %133 = sbr.rel (%p131) target = $region28
        $region27: #{tpu_custom_call.1} parent=23 // pred_region
          %s134 = sand.u32 %s22, 1
          %s135 = scalar_lea.sflag [#allocation3], %s134
          %s136 = sand.u32 %s22, 1
          %s137 = smul.addr %s136, 64
          %s138 = scalar_lea.vmem [#allocation2], %s137
          %s139 = smul.u32 4, %s12
          %s141 = ssub.s32 1024, 1024
          %142 = vsyncadd %s135, %s141
          %s143 = smul.addr %s139, 2
          %s144 = smul.addr %s143, 128
          %s145 = scalar_lea.hbm %s0, %s144
          %s146 = sshll.u32 %s138, 4
          %s147 = int_to_ptr.vmem [resolvable:$true] %s146
          %152 = dma.hbm_to_vmem [thread:$0]  %s145, 1024, %s147, %s135, 128, 128, 8
        $region28: #{tpu_custom_call.1} parent=23 // pred_fallthru
          _
      $region24: #{tpu_custom_call.1} parent=5 // pred_fallthru
        _
      %p153 = scmp.le.s32.totalorder 1, %s12
      %p154 = scmp.lt.s32.totalorder %s12, 3
      %p155 = pnand %p153, %p154
      %p156 = pneg %p155
      // Predicated region
      $region29: #{tpu_custom_call.1} parent=5 // pred_check
        _
      $region30: #{tpu_custom_call.1} parent=5 // pred_check_branch
        %158 = sbr.rel (%p155) target = $region32
      $region31: #{tpu_custom_call.1} parent=5 // pred_region
        %s159 = ssub.s32 %s12, 1
        %s160 = sand.u32 %s25, 1
        %s161 = scalar_lea.sflag [#allocation3], %s160
        %s162 = sand.u32 %s25, 1
        %s163 = smul.addr %s162, 64
        %s164 = scalar_lea.vmem [#allocation2], %s163
        // Predicated region
        $region33: #{tpu_custom_call.1} parent=31 // pred_check
          %p165 = pneg %p38
        $region34: #{tpu_custom_call.1} parent=31 // pred_check_branch
          %167 = sbr.rel (%p165) target = $region36
        $region35: #{tpu_custom_call.1} parent=31 // pred_region
          %168 = dma.done %s161, 1024
        $region36: #{tpu_custom_call.1} parent=31 // pred_fallthru
          _
        %s169 = sand.u32 %s25, 1
        %s170 = scalar_lea.sflag [#allocation3], %s169
        %s171 = sand.u32 %s25, 1
        %s172 = smul.addr %s171, 64
        %s173 = scalar_lea.vmem [#allocation2], %s172
        %p174 = pneg %p38
        %p175 = pneg %p35
        %p176 = pneg %p59
        %p177 = pneg %p56
        %p178 = pneg %p80
        %p179 = pneg %p77
        %p180 = pneg %p106
        %p181 = pneg %p103
        %s182 = smul.u32 4, %s17
        %p183 = scmp.lt.s32.totalorder %s182, 7
        %s184 = scalar_select %p183, %s182, 7
        %s185 = smul.addr %s184, 4
        %s186 = scalar_lea.vmem %s3, %s185
        %s187 = smul.u32 4, %s17
        %s188 = smul.u32 4, %s17
        %p189 = scmp.lt.s32.totalorder %s188, 7
        %s190 = scalar_select %p189, %s188, 7
        %s191 = smul.addr %s190, 4
        %s192 = scalar_lea.vmem %s3, %s191
        %s193 = smul.u32 4, %s17
        %v194 = vld [vmem:[%s1] sm:$0xf]
        %v195 = vld [vmem:[%s2] sm:$0xff]
        %v196 = vld [vmem:[%s2 + $0x8] sm:$0xff]
        %v197 = vld [vmem:[%s164] sm:$0xff]
        %v198 = vld [vmem:[%s164 + $0x8] sm:$0xff]
        %vm199 = vcmask 130048
        %v201 = vsel %vm199, %v194, 0
        %203 = vmatprep.subr.mxu0 0.0
        %204 = vmatpush1.msra.mxu0 %v197
        %205 = vmatprep.subr.mxu0 0.0
        %206 = vmatpush1.msra.mxu0 %v198
        %207 = vmatprep.subr.mxu0 0.0
        %208 = vmatpush1.msra.mxu0 0.0
        %209 = vmatprep.subr.mxu0 0.0
        %210 = vmatpush1.msra.mxu0 0.0
        %211 = vmatprep.subr.mxu0 0.0
        %212 = vmatpush1.msra.mxu0 0.0
        %213 = vmatprep.subr.mxu0 0.0
        %214 = vmatpush1.msra.mxu0 0.0
        %215 = vmatprep.subr.mxu0 0.0
        %216 = vmatpush1.msra.mxu0 0.0
        %217 = vmatprep.subr.mxu0 0.0
        %218 = vmatpush1.msra.mxu0 0.0
        %219 = vmatprep.subr.mxu0 0.0
        %220 = vmatpush1.msra.mxu0 0.0
        %221 = vmatprep.subr.mxu0 0.0
        %222 = vmatpush1.msra.mxu0 0.0
        %223 = vmatprep.subr.mxu0 0.0
        %224 = vmatpush1.msra.mxu0 0.0
        %225 = vmatprep.subr.mxu0 0.0
        %226 = vmatpush1.msra.mxu0 0.0
        %227 = vmatprep.subr.mxu0 0.0
        %228 = vmatpush1.msra.mxu0 0.0
        %229 = vmatprep.subr.mxu0 0.0
        %230 = vmatpush1.msra.mxu0 0.0
        %231 = vmatprep.subr.mxu0 0.0
        %232 = vmatpush1.msra.mxu0 0.0
        %233 = vmatprep.subr.mxu0 0.0
        %234 = vmatpush1.msra.mxu0 0.0
        %235 = vmatprep.subr.mxu0 0.0
        %236 = vmatpush1.msra.mxu0 0.0
        %237 = vmatprep.subr.mxu0 0.0
        %238 = vmatpush1.msra.mxu0 0.0
        %239 = vmatprep.subr.mxu0 0.0
        %240 = vmatpush1.msra.mxu0 0.0
        %241 = vmatprep.subr.mxu0 0.0
        %242 = vmatpush1.msra.mxu0 0.0
        %243 = vmatprep.subr.mxu0 0.0
        %244 = vmatpush1.msra.mxu0 0.0
        %245 = vmatprep.subr.mxu0 0.0
        %246 = vmatpush1.msra.mxu0 0.0
        %247 = vmatprep.subr.mxu0 0.0
        %248 = vmatpush1.msra.mxu0 0.0
        %249 = vmatprep.subr.mxu0 0.0
        %250 = vmatpush1.msra.mxu0 0.0
        %251 = vmatprep.subr.mxu0 0.0
        %252 = vmatpush1.msra.mxu0 0.0
        %253 = vmatprep.subr.mxu0 0.0
        %254 = vmatpush1.msra.mxu0 0.0
        %255 = vmatprep.subr.mxu0 0.0
        %256 = vmatpush1.msra.mxu0 0.0
        %257 = vmatprep.subr.mxu0 0.0
        %258 = vmatpush1.msra.mxu0 0.0
        %259 = vmatprep.subr.mxu0 0.0
        %260 = vmatpush1.msra.mxu0 0.0
        %261 = vmatprep.subr.mxu0 0.0
        %262 = vmatpush1.msra.mxu0 0.0
        %263 = vmatprep.subr.mxu0 0.0
        %264 = vmatpush1.msra.mxu0 0.0
        %265 = vmatprep.subr.mxu0 0.0
        %266 = vmatpush1.msra.mxu0 0.0
        %267 = vmatprep.mubr.f32.mxu0 0.0
        %268 = vmatmul.mubr.f32.gmra.mrb[0].mxu0 %v201
        %v269 = vpop.f32.mrb[0].mxu0
        %v270 = vadd.f32 0.0, %v269
        %v271 = vpop.f32.mrb[0].mxu0
        %272 = vdwg.mxu0
        %v274 = vsel %vm199, %v270, 0
        %276 = vmatprep.subr.mxu0 0.0
        %277 = vmatpush1.msra.mxu0 %v195
        %278 = vmatprep.subr.mxu0 0.0
        %279 = vmatpush1.msra.mxu0 %v196
        %280 = vmatprep.subr.mxu0 0.0
        %281 = vmatpush1.msra.mxu0 0.0
        %282 = vmatprep.subr.mxu0 0.0
        %283 = vmatpush1.msra.mxu0 0.0
        %284 = vmatprep.subr.mxu0 0.0
        %285 = vmatpush1.msra.mxu0 0.0
        %286 = vmatprep.subr.mxu0 0.0
        %287 = vmatpush1.msra.mxu0 0.0
        %288 = vmatprep.subr.mxu0 0.0
        %289 = vmatpush1.msra.mxu0 0.0
        %290 = vmatprep.subr.mxu0 0.0
        %291 = vmatpush1.msra.mxu0 0.0
        %292 = vmatprep.subr.mxu0 0.0
        %293 = vmatpush1.msra.mxu0 0.0
        %294 = vmatprep.subr.mxu0 0.0
        %295 = vmatpush1.msra.mxu0 0.0
        %296 = vmatprep.subr.mxu0 0.0
        %297 = vmatpush1.msra.mxu0 0.0
        %298 = vmatprep.subr.mxu0 0.0
        %299 = vmatpush1.msra.mxu0 0.0
        %300 = vmatprep.subr.mxu0 0.0
        %301 = vmatpush1.msra.mxu0 0.0
        %302 = vmatprep.subr.mxu0 0.0
        %303 = vmatpush1.msra.mxu0 0.0
        %304 = vmatprep.subr.mxu0 0.0
        %305 = vmatpush1.msra.mxu0 0.0
        %306 = vmatprep.subr.mxu0 0.0
        %307 = vmatpush1.msra.mxu0 0.0
        %308 = vmatprep.subr.mxu0 0.0
        %309 = vmatpush1.msra.mxu0 0.0
        %310 = vmatprep.subr.mxu0 0.0
        %311 = vmatpush1.msra.mxu0 0.0
        %312 = vmatprep.subr.mxu0 0.0
        %313 = vmatpush1.msra.mxu0 0.0
        %314 = vmatprep.subr.mxu0 0.0
        %315 = vmatpush1.msra.mxu0 0.0
        %316 = vmatprep.subr.mxu0 0.0
        %317 = vmatpush1.msra.mxu0 0.0
        %318 = vmatprep.subr.mxu0 0.0
        %319 = vmatpush1.msra.mxu0 0.0
        %320 = vmatprep.subr.mxu0 0.0
        %321 = vmatpush1.msra.mxu0 0.0
        %322 = vmatprep.subr.mxu0 0.0
        %323 = vmatpush1.msra.mxu0 0.0
        %324 = vmatprep.subr.mxu0 0.0
        %325 = vmatpush1.msra.mxu0 0.0
        %326 = vmatprep.subr.mxu0 0.0
        %327 = vmatpush1.msra.mxu0 0.0
        %328 = vmatprep.subr.mxu0 0.0
        %329 = vmatpush1.msra.mxu0 0.0
        %330 = vmatprep.subr.mxu0 0.0
        %331 = vmatpush1.msra.mxu0 0.0
        %332 = vmatprep.subr.mxu0 0.0
        %333 = vmatpush1.msra.mxu0 0.0
        %334 = vmatprep.subr.mxu0 0.0
        %335 = vmatpush1.msra.mxu0 0.0
        %336 = vmatprep.subr.mxu0 0.0
        %337 = vmatpush1.msra.mxu0 0.0
        %338 = vmatprep.subr.mxu0 0.0
        %339 = vmatpush1.msra.mxu0 0.0
        %340 = vmatprep.mubr.f32.mxu0 0.0
        %341 = vmatmul.mubr.f32.gmra.mrb[0].mxu0 %v274
        %v342 = vpop.f32.mrb[0].mxu0
        %v343 = vadd.f32 0.0, %v342
        %v344 = vpop.f32.mrb[0].mxu0
        %345 = vdwg.mxu0
        %v346 = vmul.f32 %v343, 0.012345679
        %vm347 = vcmask 27648
        %348 = vst.msk [vmem:[%s192] sm:$0xf] %vm347, %v346
        %s349 = scalar_lea.vmem %s164, 16 [#allocation2]
        %v350 = vld [vmem:[%s349] sm:$0xff]
        %v351 = vld [vmem:[%s349 + $0x8] sm:$0xff]
        %352 = vmatprep.subr.mxu0 0.0
        %353 = vmatpush1.msra.mxu0 %v350
        %354 = vmatprep.subr.mxu0 0.0
        %355 = vmatpush1.msra.mxu0 %v351
        %356 = vmatprep.subr.mxu0 0.0
        %357 = vmatpush1.msra.mxu0 0.0
        %358 = vmatprep.subr.mxu0 0.0
        %359 = vmatpush1.msra.mxu0 0.0
        %360 = vmatprep.subr.mxu0 0.0
        %361 = vmatpush1.msra.mxu0 0.0
        %362 = vmatprep.subr.mxu0 0.0
        %363 = vmatpush1.msra.mxu0 0.0
        %364 = vmatprep.subr.mxu0 0.0
        %365 = vmatpush1.msra.mxu0 0.0
        %366 = vmatprep.subr.mxu0 0.0
        %367 = vmatpush1.msra.mxu0 0.0
        %368 = vmatprep.subr.mxu0 0.0
        %369 = vmatpush1.msra.mxu0 0.0
        %370 = vmatprep.subr.mxu0 0.0
        %371 = vmatpush1.msra.mxu0 0.0
        %372 = vmatprep.subr.mxu0 0.0
        %373 = vmatpush1.msra.mxu0 0.0
        %374 = vmatprep.subr.mxu0 0.0
        %375 = vmatpush1.msra.mxu0 0.0
        %376 = vmatprep.subr.mxu0 0.0
        %377 = vmatpush1.msra.mxu0 0.0
        %378 = vmatprep.subr.mxu0 0.0
        %379 = vmatpush1.msra.mxu0 0.0
        %380 = vmatprep.subr.mxu0 0.0
        %381 = vmatpush1.msra.mxu0 0.0
        %382 = vmatprep.subr.mxu0 0.0
        %383 = vmatpush1.msra.mxu0 0.0
        %384 = vmatprep.subr.mxu0 0.0
        %385 = vmatpush1.msra.mxu0 0.0
        %386 = vmatprep.subr.mxu0 0.0
        %387 = vmatpush1.msra.mxu0 0.0
        %388 = vmatprep.subr.mxu0 0.0
        %389 = vmatpush1.msra.mxu0 0.0
        %390 = vmatprep.subr.mxu0 0.0
        %391 = vmatpush1.msra.mxu0 0.0
        %392 = vmatprep.subr.mxu0 0.0
        %393 = vmatpush1.msra.mxu0 0.0
        %394 = vmatprep.subr.mxu0 0.0
        %395 = vmatpush1.msra.mxu0 0.0
        %396 = vmatprep.subr.mxu0 0.0
        %397 = vmatpush1.msra.mxu0 0.0
        %398 = vmatprep.subr.mxu0 0.0
        %399 = vmatpush1.msra.mxu0 0.0
        %400 = vmatprep.subr.mxu0 0.0
        %401 = vmatpush1.msra.mxu0 0.0
        %402 = vmatprep.subr.mxu0 0.0
        %403 = vmatpush1.msra.mxu0 0.0
        %404 = vmatprep.subr.mxu0 0.0
        %405 = vmatpush1.msra.mxu0 0.0
        %406 = vmatprep.subr.mxu0 0.0
        %407 = vmatpush1.msra.mxu0 0.0
        %408 = vmatprep.subr.mxu0 0.0
        %409 = vmatpush1.msra.mxu0 0.0
        %410 = vmatprep.subr.mxu0 0.0
        %411 = vmatpush1.msra.mxu0 0.0
        %412 = vmatprep.subr.mxu0 0.0
        %413 = vmatpush1.msra.mxu0 0.0
        %414 = vmatprep.subr.mxu0 0.0
        %415 = vmatpush1.msra.mxu0 0.0
        %416 = vmatprep.mubr.f32.mxu0 0.0
        %417 = vmatmul.mubr.f32.gmra.mrb[0].mxu0 %v201
        %v418 = vpop.f32.mrb[0].mxu0
        %v419 = vadd.f32 0.0, %v418
        %v420 = vpop.f32.mrb[0].mxu0
        %421 = vdwg.mxu0
        %v423 = vsel %vm199, %v419, 0
        %425 = vmatprep.subr.mxu0 0.0
        %426 = vmatpush1.msra.mxu0 %v195
        %427 = vmatprep.subr.mxu0 0.0
        %428 = vmatpush1.msra.mxu0 %v196
        %429 = vmatprep.subr.mxu0 0.0
        %430 = vmatpush1.msra.mxu0 0.0
        %431 = vmatprep.subr.mxu0 0.0
        %432 = vmatpush1.msra.mxu0 0.0
        %433 = vmatprep.subr.mxu0 0.0
        %434 = vmatpush1.msra.mxu0 0.0
        %435 = vmatprep.subr.mxu0 0.0
        %436 = vmatpush1.msra.mxu0 0.0
        %437 = vmatprep.subr.mxu0 0.0
        %438 = vmatpush1.msra.mxu0 0.0
        %439 = vmatprep.subr.mxu0 0.0
        %440 = vmatpush1.msra.mxu0 0.0
        %441 = vmatprep.subr.mxu0 0.0
        %442 = vmatpush1.msra.mxu0 0.0
        %443 = vmatprep.subr.mxu0 0.0
        %444 = vmatpush1.msra.mxu0 0.0
        %445 = vmatprep.subr.mxu0 0.0
        %446 = vmatpush1.msra.mxu0 0.0
        %447 = vmatprep.subr.mxu0 0.0
        %448 = vmatpush1.msra.mxu0 0.0
        %449 = vmatprep.subr.mxu0 0.0
        %450 = vmatpush1.msra.mxu0 0.0
        %451 = vmatprep.subr.mxu0 0.0
        %452 = vmatpush1.msra.mxu0 0.0
        %453 = vmatprep.subr.mxu0 0.0
        %454 = vmatpush1.msra.mxu0 0.0
        %455 = vmatprep.subr.mxu0 0.0
        %456 = vmatpush1.msra.mxu0 0.0
        %457 = vmatprep.subr.mxu0 0.0
        %458 = vmatpush1.msra.mxu0 0.0
        %459 = vmatprep.subr.mxu0 0.0
        %460 = vmatpush1.msra.mxu0 0.0
        %461 = vmatprep.subr.mxu0 0.0
        %462 = vmatpush1.msra.mxu0 0.0
        %463 = vmatprep.subr.mxu0 0.0
        %464 = vmatpush1.msra.mxu0 0.0
        %465 = vmatprep.subr.mxu0 0.0
        %466 = vmatpush1.msra.mxu0 0.0
        %467 = vmatprep.subr.mxu0 0.0
        %468 = vmatpush1.msra.mxu0 0.0
        %469 = vmatprep.subr.mxu0 0.0
        %470 = vmatpush1.msra.mxu0 0.0
        %471 = vmatprep.subr.mxu0 0.0
        %472 = vmatpush1.msra.mxu0 0.0
        %473 = vmatprep.subr.mxu0 0.0
        %474 = vmatpush1.msra.mxu0 0.0
        %475 = vmatprep.subr.mxu0 0.0
        %476 = vmatpush1.msra.mxu0 0.0
        %477 = vmatprep.subr.mxu0 0.0
        %478 = vmatpush1.msra.mxu0 0.0
        %479 = vmatprep.subr.mxu0 0.0
        %480 = vmatpush1.msra.mxu0 0.0
        %481 = vmatprep.subr.mxu0 0.0
        %482 = vmatpush1.msra.mxu0 0.0
        %483 = vmatprep.subr.mxu0 0.0
        %484 = vmatpush1.msra.mxu0 0.0
        %485 = vmatprep.subr.mxu0 0.0
        %486 = vmatpush1.msra.mxu0 0.0
        %487 = vmatprep.subr.mxu0 0.0
        %488 = vmatpush1.msra.mxu0 0.0
        %489 = vmatprep.mubr.f32.mxu0 0.0
        %490 = vmatmul.mubr.f32.gmra.mrb[0].mxu0 %v423
        %v491 = vpop.f32.mrb[0].mxu0
        %v492 = vadd.f32 0.0, %v491
        %v493 = vpop.f32.mrb[0].mxu0
        %494 = vdwg.mxu0
        %v495 = vmul.f32 %v492, 0.012345679
        %s496 = scalar_lea.vmem %s192, 4
        %497 = vst.msk [vmem:[%s496] sm:$0xf] %vm347, %v495
        %s498 = scalar_lea.vmem %s164, 32 [#allocation2]
        %v499 = vld [vmem:[%s498] sm:$0xff]
        %v500 = vld [vmem:[%s498 + $0x8] sm:$0xff]
        %501 = vmatprep.subr.mxu0 0.0
        %502 = vmatpush1.msra.mxu0 %v499
        %503 = vmatprep.subr.mxu0 0.0
        %504 = vmatpush1.msra.mxu0 %v500
        %505 = vmatprep.subr.mxu0 0.0
        %506 = vmatpush1.msra.mxu0 0.0
        %507 = vmatprep.subr.mxu0 0.0
        %508 = vmatpush1.msra.mxu0 0.0
        %509 = vmatprep.subr.mxu0 0.0
        %510 = vmatpush1.msra.mxu0 0.0
        %511 = vmatprep.subr.mxu0 0.0
        %512 = vmatpush1.msra.mxu0 0.0
        %513 = vmatprep.subr.mxu0 0.0
        %514 = vmatpush1.msra.mxu0 0.0
        %515 = vmatprep.subr.mxu0 0.0
        %516 = vmatpush1.msra.mxu0 0.0
        %517 = vmatprep.subr.mxu0 0.0
        %518 = vmatpush1.msra.mxu0 0.0
        %519 = vmatprep.subr.mxu0 0.0
        %520 = vmatpush1.msra.mxu0 0.0
        %521 = vmatprep.subr.mxu0 0.0
        %522 = vmatpush1.msra.mxu0 0.0
        %523 = vmatprep.subr.mxu0 0.0
        %524 = vmatpush1.msra.mxu0 0.0
        %525 = vmatprep.subr.mxu0 0.0
        %526 = vmatpush1.msra.mxu0 0.0
        %527 = vmatprep.subr.mxu0 0.0
        %528 = vmatpush1.msra.mxu0 0.0
        %529 = vmatprep.subr.mxu0 0.0
        %530 = vmatpush1.msra.mxu0 0.0
        %531 = vmatprep.subr.mxu0 0.0
        %532 = vmatpush1.msra.mxu0 0.0
        %533 = vmatprep.subr.mxu0 0.0
        %534 = vmatpush1.msra.mxu0 0.0
        %535 = vmatprep.subr.mxu0 0.0
        %536 = vmatpush1.msra.mxu0 0.0
        %537 = vmatprep.subr.mxu0 0.0
        %538 = vmatpush1.msra.mxu0 0.0
        %539 = vmatprep.subr.mxu0 0.0
        %540 = vmatpush1.msra.mxu0 0.0
        %541 = vmatprep.subr.mxu0 0.0
        %542 = vmatpush1.msra.mxu0 0.0
        %543 = vmatprep.subr.mxu0 0.0
        %544 = vmatpush1.msra.mxu0 0.0
        %545 = vmatprep.subr.mxu0 0.0
        %546 = vmatpush1.msra.mxu0 0.0
        %547 = vmatprep.subr.mxu0 0.0
        %548 = vmatpush1.msra.mxu0 0.0
        %549 = vmatprep.subr.mxu0 0.0
        %550 = vmatpush1.msra.mxu0 0.0
        %551 = vmatprep.subr.mxu0 0.0
        %552 = vmatpush1.msra.mxu0 0.0
        %553 = vmatprep.subr.mxu0 0.0
        %554 = vmatpush1.msra.mxu0 0.0
        %555 = vmatprep.subr.mxu0 0.0
        %556 = vmatpush1.msra.mxu0 0.0
        %557 = vmatprep.subr.mxu0 0.0
        %558 = vmatpush1.msra.mxu0 0.0
        %559 = vmatprep.subr.mxu0 0.0
        %560 = vmatpush1.msra.mxu0 0.0
        %561 = vmatprep.subr.mxu0 0.0
        %562 = vmatpush1.msra.mxu0 0.0
        %563 = vmatprep.subr.mxu0 0.0
        %564 = vmatpush1.msra.mxu0 0.0
        %565 = vmatprep.mubr.f32.mxu0 0.0
        %566 = vmatmul.mubr.f32.gmra.mrb[0].mxu0 %v201
        %v567 = vpop.f32.mrb[0].mxu0
        %v568 = vadd.f32 0.0, %v567
        %v569 = vpop.f32.mrb[0].mxu0
        %570 = vdwg.mxu0
        %v572 = vsel %vm199, %v568, 0
        %574 = vmatprep.subr.mxu0 0.0
        %575 = vmatpush1.msra.mxu0 %v195
        %576 = vmatprep.subr.mxu0 0.0
        %577 = vmatpush1.msra.mxu0 %v196
        %578 = vmatprep.subr.mxu0 0.0
        %579 = vmatpush1.msra.mxu0 0.0
        %580 = vmatprep.subr.mxu0 0.0
        %581 = vmatpush1.msra.mxu0 0.0
        %582 = vmatprep.subr.mxu0 0.0
        %583 = vmatpush1.msra.mxu0 0.0
        %584 = vmatprep.subr.mxu0 0.0
        %585 = vmatpush1.msra.mxu0 0.0
        %586 = vmatprep.subr.mxu0 0.0
        %587 = vmatpush1.msra.mxu0 0.0
        %588 = vmatprep.subr.mxu0 0.0
        %589 = vmatpush1.msra.mxu0 0.0
        %590 = vmatprep.subr.mxu0 0.0
        %591 = vmatpush1.msra.mxu0 0.0
        %592 = vmatprep.subr.mxu0 0.0
        %593 = vmatpush1.msra.mxu0 0.0
        %594 = vmatprep.subr.mxu0 0.0
        %595 = vmatpush1.msra.mxu0 0.0
        %596 = vmatprep.subr.mxu0 0.0
        %597 = vmatpush1.msra.mxu0 0.0
        %598 = vmatprep.subr.mxu0 0.0
        %599 = vmatpush1.msra.mxu0 0.0
        %600 = vmatprep.subr.mxu0 0.0
        %601 = vmatpush1.msra.mxu0 0.0
        %602 = vmatprep.subr.mxu0 0.0
        %603 = vmatpush1.msra.mxu0 0.0
        %604 = vmatprep.subr.mxu0 0.0
        %605 = vmatpush1.msra.mxu0 0.0
        %606 = vmatprep.subr.mxu0 0.0
        %607 = vmatpush1.msra.mxu0 0.0
        %608 = vmatprep.subr.mxu0 0.0
        %609 = vmatpush1.msra.mxu0 0.0
        %610 = vmatprep.subr.mxu0 0.0
        %611 = vmatpush1.msra.mxu0 0.0
        %612 = vmatprep.subr.mxu0 0.0
        %613 = vmatpush1.msra.mxu0 0.0
        %614 = vmatprep.subr.mxu0 0.0
        %615 = vmatpush1.msra.mxu0 0.0
        %616 = vmatprep.subr.mxu0 0.0
        %617 = vmatpush1.msra.mxu0 0.0
        %618 = vmatprep.subr.mxu0 0.0
        %619 = vmatpush1.msra.mxu0 0.0
        %620 = vmatprep.subr.mxu0 0.0
        %621 = vmatpush1.msra.mxu0 0.0
        %622 = vmatprep.subr.mxu0 0.0
        %623 = vmatpush1.msra.mxu0 0.0
        %624 = vmatprep.subr.mxu0 0.0
        %625 = vmatpush1.msra.mxu0 0.0
        %626 = vmatprep.subr.mxu0 0.0
        %627 = vmatpush1.msra.mxu0 0.0
        %628 = vmatprep.subr.mxu0 0.0
        %629 = vmatpush1.msra.mxu0 0.0
        %630 = vmatprep.subr.mxu0 0.0
        %631 = vmatpush1.msra.mxu0 0.0
        %632 = vmatprep.subr.mxu0 0.0
        %633 = vmatpush1.msra.mxu0 0.0
        %634 = vmatprep.subr.mxu0 0.0
        %635 = vmatpush1.msra.mxu0 0.0
        %636 = vmatprep.subr.mxu0 0.0
        %637 = vmatpush1.msra.mxu0 0.0
        %638 = vmatprep.mubr.f32.mxu0 0.0
        %639 = vmatmul.mubr.f32.gmra.mrb[0].mxu0 %v572
        %v640 = vpop.f32.mrb[0].mxu0
        %v641 = vadd.f32 0.0, %v640
        %v642 = vpop.f32.mrb[0].mxu0
        %643 = vdwg.mxu0
        %v644 = vmul.f32 %v641, 0.012345679
        %s645 = scalar_lea.vmem %s192, 8
        %646 = vst.msk [vmem:[%s645] sm:$0xf] %vm347, %v644
        %s647 = scalar_lea.vmem %s164, 48 [#allocation2]
        %v648 = vld [vmem:[%s647] sm:$0xff]
        %v649 = vld [vmem:[%s647 + $0x8] sm:$0xff]
        %650 = vmatprep.subr.mxu0 0.0
        %651 = vmatpush1.msra.mxu0 %v648
        %652 = vmatprep.subr.mxu0 0.0
        %653 = vmatpush1.msra.mxu0 %v649
        %654 = vmatprep.subr.mxu0 0.0
        %655 = vmatpush1.msra.mxu0 0.0
        %656 = vmatprep.subr.mxu0 0.0
        %657 = vmatpush1.msra.mxu0 0.0
        %658 = vmatprep.subr.mxu0 0.0
        %659 = vmatpush1.msra.mxu0 0.0
        %660 = vmatprep.subr.mxu0 0.0
        %661 = vmatpush1.msra.mxu0 0.0
        %662 = vmatprep.subr.mxu0 0.0
        %663 = vmatpush1.msra.mxu0 0.0
        %664 = vmatprep.subr.mxu0 0.0
        %665 = vmatpush1.msra.mxu0 0.0
        %666 = vmatprep.subr.mxu0 0.0
        %667 = vmatpush1.msra.mxu0 0.0
        %668 = vmatprep.subr.mxu0 0.0
        %669 = vmatpush1.msra.mxu0 0.0
        %670 = vmatprep.subr.mxu0 0.0
        %671 = vmatpush1.msra.mxu0 0.0
        %672 = vmatprep.subr.mxu0 0.0
        %673 = vmatpush1.msra.mxu0 0.0
        %674 = vmatprep.subr.mxu0 0.0
        %675 = vmatpush1.msra.mxu0 0.0
        %676 = vmatprep.subr.mxu0 0.0
        %677 = vmatpush1.msra.mxu0 0.0
        %678 = vmatprep.subr.mxu0 0.0
        %679 = vmatpush1.msra.mxu0 0.0
        %680 = vmatprep.subr.mxu0 0.0
        %681 = vmatpush1.msra.mxu0 0.0
        %682 = vmatprep.subr.mxu0 0.0
        %683 = vmatpush1.msra.mxu0 0.0
        %684 = vmatprep.subr.mxu0 0.0
        %685 = vmatpush1.msra.mxu0 0.0
        %686 = vmatprep.subr.mxu0 0.0
        %687 = vmatpush1.msra.mxu0 0.0
        %688 = vmatprep.subr.mxu0 0.0
        %689 = vmatpush1.msra.mxu0 0.0
        %690 = vmatprep.subr.mxu0 0.0
        %691 = vmatpush1.msra.mxu0 0.0
        %692 = vmatprep.subr.mxu0 0.0
        %693 = vmatpush1.msra.mxu0 0.0
        %694 = vmatprep.subr.mxu0 0.0
        %695 = vmatpush1.msra.mxu0 0.0
        %696 = vmatprep.subr.mxu0 0.0
        %697 = vmatpush1.msra.mxu0 0.0
        %698 = vmatprep.subr.mxu0 0.0
        %699 = vmatpush1.msra.mxu0 0.0
        %700 = vmatprep.subr.mxu0 0.0
        %701 = vmatpush1.msra.mxu0 0.0
        %702 = vmatprep.subr.mxu0 0.0
        %703 = vmatpush1.msra.mxu0 0.0
        %704 = vmatprep.subr.mxu0 0.0
        %705 = vmatpush1.msra.mxu0 0.0
        %706 = vmatprep.subr.mxu0 0.0
        %707 = vmatpush1.msra.mxu0 0.0
        %708 = vmatprep.subr.mxu0 0.0
        %709 = vmatpush1.msra.mxu0 0.0
        %710 = vmatprep.subr.mxu0 0.0
        %711 = vmatpush1.msra.mxu0 0.0
        %712 = vmatprep.subr.mxu0 0.0
        %713 = vmatpush1.msra.mxu0 0.0
        %714 = vmatprep.mubr.f32.mxu0 0.0
        %715 = vmatmul.mubr.f32.gmra.mrb[0].mxu0 %v201
        %v716 = vpop.f32.mrb[0].mxu0
        %v717 = vadd.f32 0.0, %v716
        %v718 = vpop.f32.mrb[0].mxu0
        %719 = vdwg.mxu0
        %v721 = vsel %vm199, %v717, 0
        %723 = vmatprep.subr.mxu0 0.0
        %724 = vmatpush1.msra.mxu0 %v195
        %725 = vmatprep.subr.mxu0 0.0
        %726 = vmatpush1.msra.mxu0 %v196
        %727 = vmatprep.subr.mxu0 0.0
        %728 = vmatpush1.msra.mxu0 0.0
        %729 = vmatprep.subr.mxu0 0.0
        %730 = vmatpush1.msra.mxu0 0.0
        %731 = vmatprep.subr.mxu0 0.0
        %732 = vmatpush1.msra.mxu0 0.0
        %733 = vmatprep.subr.mxu0 0.0
        %734 = vmatpush1.msra.mxu0 0.0
        %735 = vmatprep.subr.mxu0 0.0
        %736 = vmatpush1.msra.mxu0 0.0
        %737 = vmatprep.subr.mxu0 0.0
        %738 = vmatpush1.msra.mxu0 0.0
        %739 = vmatprep.subr.mxu0 0.0
        %740 = vmatpush1.msra.mxu0 0.0
        %741 = vmatprep.subr.mxu0 0.0
        %742 = vmatpush1.msra.mxu0 0.0
        %743 = vmatprep.subr.mxu0 0.0
        %744 = vmatpush1.msra.mxu0 0.0
        %745 = vmatprep.subr.mxu0 0.0
        %746 = vmatpush1.msra.mxu0 0.0
        %747 = vmatprep.subr.mxu0 0.0
        %748 = vmatpush1.msra.mxu0 0.0
        %749 = vmatprep.subr.mxu0 0.0
        %750 = vmatpush1.msra.mxu0 0.0
        %751 = vmatprep.subr.mxu0 0.0
        %752 = vmatpush1.msra.mxu0 0.0
        %753 = vmatprep.subr.mxu0 0.0
        %754 = vmatpush1.msra.mxu0 0.0
        %755 = vmatprep.subr.mxu0 0.0
        %756 = vmatpush1.msra.mxu0 0.0
        %757 = vmatprep.subr.mxu0 0.0
        %758 = vmatpush1.msra.mxu0 0.0
        %759 = vmatprep.subr.mxu0 0.0
        %760 = vmatpush1.msra.mxu0 0.0
        %761 = vmatprep.subr.mxu0 0.0
        %762 = vmatpush1.msra.mxu0 0.0
        %763 = vmatprep.subr.mxu0 0.0
        %764 = vmatpush1.msra.mxu0 0.0
        %765 = vmatprep.subr.mxu0 0.0
        %766 = vmatpush1.msra.mxu0 0.0
        %767 = vmatprep.subr.mxu0 0.0
        %768 = vmatpush1.msra.mxu0 0.0
        %769 = vmatprep.subr.mxu0 0.0
        %770 = vmatpush1.msra.mxu0 0.0
        %771 = vmatprep.subr.mxu0 0.0
        %772 = vmatpush1.msra.mxu0 0.0
        %773 = vmatprep.subr.mxu0 0.0
        %774 = vmatpush1.msra.mxu0 0.0
        %775 = vmatprep.subr.mxu0 0.0
        %776 = vmatpush1.msra.mxu0 0.0
        %777 = vmatprep.subr.mxu0 0.0
        %778 = vmatpush1.msra.mxu0 0.0
        %779 = vmatprep.subr.mxu0 0.0
        %780 = vmatpush1.msra.mxu0 0.0
        %781 = vmatprep.subr.mxu0 0.0
        %782 = vmatpush1.msra.mxu0 0.0
        %783 = vmatprep.subr.mxu0 0.0
        %784 = vmatpush1.msra.mxu0 0.0
        %785 = vmatprep.subr.mxu0 0.0
        %786 = vmatpush1.msra.mxu0 0.0
        %787 = vmatprep.mubr.f32.mxu0 0.0
        %788 = vmatmul.mubr.f32.gmra.mrb[0].mxu0 %v721
        %v789 = vpop.f32.mrb[0].mxu0
        %v790 = vadd.f32 0.0, %v789
        %v791 = vpop.f32.mrb[0].mxu0
        %792 = vdwg.mxu0
        %v793 = vmul.f32 %v790, 0.012345679
        %s794 = scalar_lea.vmem %s192, 12
        %795 = vst.msk [vmem:[%s794] sm:$0xf] %vm347, %v793
        %s796 = smul.u32 4, %s17
        %p797 = scmp.lt.s32.totalorder %s796, 7
        %s798 = scalar_select %p797, %s796, 7
        %s799 = smul.addr %s798, 4
        %s800 = scalar_lea.vmem %s3, %s799
        // Predicated region
        $region37: #{tpu_custom_call.1} parent=31 // pred_check
          %p801 = pneg %p103
        $region38: #{tpu_custom_call.1} parent=31 // pred_check_branch
          %803 = sbr.rel (%p801) target = $region40
        $region39: #{tpu_custom_call.1} parent=31 // pred_region
          %s804 = smul.u32 4, %s17
        $region40: #{tpu_custom_call.1} parent=31 // pred_fallthru
          _
      $region32: #{tpu_custom_call.1} parent=5 // pred_fallthru
        _
      %p805 = scmp.le.s32.totalorder 2, %s12
      // Predicated region
      $region41: #{tpu_custom_call.1} parent=5 // pred_check
        %p806 = pneg %p805
      $region42: #{tpu_custom_call.1} parent=5 // pred_check_branch
        %808 = sbr.rel (%p806) target = $region44
      $region43: #{tpu_custom_call.1} parent=5 // pred_region
        %s809 = ssub.s32 %s12, 2
        // Predicated region
        $region45: #{tpu_custom_call.1} parent=43 // pred_check
          %p810 = pneg %p109
        $region46: #{tpu_custom_call.1} parent=43 // pred_check_branch
          %812 = sbr.rel (%p810) target = $region48
        $region47: #{tpu_custom_call.1} parent=43 // pred_region
          %s813 = smul.u32 4, %s18
          %p814 = scmp.lt.s32.totalorder %s813, 7
          %s815 = scalar_select %p814, %s813, 7
          %s816 = smul.addr %s815, 4
          %s817 = scalar_lea.vmem %s3, %s816
        $region48: #{tpu_custom_call.1} parent=43 // pred_fallthru
          _
      $region44: #{tpu_custom_call.1} parent=5 // pred_fallthru
        _
    $region6: #{tpu_custom_call.1} parent=1 // loop_footer
      %s16 = sadd.s32 1, %s12
    $region7: #{tpu_custom_call.1} parent=1 // loop_footer_branch
      %11 = sbr.rel target = $region3
    $region8: #{tpu_custom_call.1} parent=1 // loop_exit
      _
    %818 = vsyncpa [#allocation3], 1
    %s819 = scalar_lea.sflag [#allocation3], 1
    %820 = vsyncpa %s819, 1

</llo_original>
